<compile_context>
chip_gen: v6e
topology: v6e:2x2x1
jax: 0.10.0
libtpu: 0.0.40
codegen_flags: <defaults>
</compile_context>

<pallas_src>
import functools

import jax
import jax.numpy as jnp
from jax.experimental import pallas as pl
from jax.experimental.pallas import tpu as pltpu

LANES = 128
SUBLANES = 8


def _round_up(x, m):
    return ((x + m - 1) // m) * m


def _num_tensorcores():
    """TensorCores per chip for megacore-style sharding of the leading
    'parallel' grid axis. 2 on v7x/v5p/v4, 1 on v5e/v6e (safe default)."""
    try:
        kind = (jax.devices()[0].device_kind or "").lower()
    except Exception:
        return 1
    return 2 if any(tag in kind for tag in ("v7", "v5p", "v4")) else 1


def _vmem_budget_bytes():
    """Usable scoped-VMEM budget: physical capacity minus headroom.
    (v5e/v6e: 128 MiB physical, v7x: 64 MiB per TensorCore.)"""
    try:
        cap = int(pltpu.get_tpu_info().vmem_capacity_bytes)
    except Exception:
        cap = 64 << 20  # conservative: v7x per-TC VMEM
    return max(16 << 20, cap - (16 << 20))


def _pick_block_rows(requested, rows, per_row_bytes, budget):
    br = max(SUBLANES, min(int(requested), _round_up(rows, SUBLANES)))
    br = _round_up(br, SUBLANES)
    max_br = max(SUBLANES,
                 (((budget - (8 << 20)) // per_row_bytes) // SUBLANES) * SUBLANES)
    return int(min(br, max_br))


def _pow_modulating(base, gamma):
    """base ** gamma with an integer-gamma fast path (no EUP pow)."""
    g = float(gamma)
    if g == int(g) and 0 <= int(g) <= 8:
        gi = int(g)
        if gi == 0:
            return jnp.ones_like(base)
        out = base
        for _ in range(gi - 1):
            out = out * base
        return out
    # TODO(synk): non-integer gamma with a possibly-negative base (raw-logit p_t,
    # exactly as in the PyTorch module) yields NaN; this matches torch behavior.
    return base ** g


def _focal_body(x, t, alpha, gamma):
    """Elementwise focal loss in f32, algebraically fused:
         ce      = max(x,0) - x*t + log1p(exp(-|x|))
         1 - p_t = x + t - 2*x*t
         alpha_t = (2a-1)*t + (1-a)   (a folded as Python constants)
    Matches the PyTorch module (p = raw logits, not sigmoid(inputs))."""
    xt = x * t
    ce = jnp.maximum(x, 0.0) - xt + jnp.log1p(jnp.exp(-jnp.abs(x)))
    one_minus_pt = (x + t) - (xt + xt)
    loss = ce * _pow_modulating(one_minus_pt, gamma)
    if alpha >= 0:
        a1 = 2.0 * float(alpha) - 1.0
        a0 = 1.0 - float(alpha)
        loss = (a1 * t + a0) * loss
    return loss


def _reduce_kernel(x_ref, t_ref, o_ref, acc_ref, *, alpha, gamma, rows_valid,
                   block_rows, inner_steps, full_steps, need_mask):
    c = pl.program_id(0)   # TensorCore split ("parallel")
    j = pl.program_id(1)   # reduction steps within this split ("arbitrary")

    @pl.when(j == 0)
    def _():
        acc_ref[...] = jnp.zeros_like(acc_ref)

    x = x_ref[...].astype(jnp.float32)
    t = t_ref[...].astype(jnp.float32)
    loss = _focal_body(x, t, alpha, gamma)

    def _fold(v):
        # (br,128) -> (8,128): pure VPU vreg adds into a single-tile accumulator.
        return v.reshape(block_rows // SUBLANES, SUBLANES, LANES).sum(axis=0)

    if need_mask:
        step = c * inner_steps + j

        @pl.when(step < full_steps)        # interior tiles: no mask work at all
        def _():
            acc_ref[...] += _fold(loss)

        @pl.when(step >= full_steps)       # ragged tail / clamped duplicate tiles
        def _():
            row = jax.lax.broadcasted_iota(jnp.int32, (block_rows, LANES), 0)
            valid = (step * block_rows + row) < rows_valid   # row-level, i32-safe
            acc_ref[...] += _fold(jnp.where(valid, loss, 0.0))
    else:
        acc_ref[...] += _fold(loss)

    @pl.when(j == pl.num_programs(1) - 1)
    def _():
        o_ref[...] = acc_ref[...].reshape(o_ref.shape)


def _elementwise_kernel(x_ref, t_ref, o_ref, *, alpha, gamma):
    x = x_ref[...].astype(jnp.float32)
    t = t_ref[...].astype(jnp.float32)
    o_ref[...] = _focal_body(x, t, alpha, gamma).astype(o_ref.dtype)


def sigmoid_focal_loss(inputs, targets, *, alpha=0.5, gamma=1.0,
                       reduction="mean", block_rows=1024):
    assert inputs.shape == targets.shape
    if reduction not in ("mean", "sum", "none"):
        raise ValueError(f"unknown reduction {reduction!r}")
    orig_shape = inputs.shape
    orig_dtype = inputs.dtype
    n = int(inputs.size)

    x_flat = inputs.reshape(-1)
    t_flat = targets.reshape(-1)

    # Lane-dense main body: the largest prefix that views as [rows, 128] with
    # zero copies. The (<128-element) ragged tail is a tiny pure-JAX op added
    # in the wrapper — no whole-array pad / output-slice HBM passes.
    rows = n // LANES
    n_main = rows * LANES
    n_tail = n - n_main

    def _tail_loss_f32():
        xt = x_flat[n_main:].astype(jnp.float32)
        tt = t_flat[n_main:].astype(jnp.float32)
        return _focal_body(xt, tt, alpha, gamma)

    if rows == 0:
        # Fewer than 128 elements: nothing lane-dense to stream.
        loss = _tail_loss_f32()
        if reduction == "mean":
            return jnp.mean(loss).astype(orig_dtype)
        if reduction == "sum":
            return jnp.sum(loss).astype(orig_dtype)
        return loss.astype(orig_dtype).reshape(orig_shape)

    x2 = (x_flat if n_tail == 0 else x_flat[:n_main]).reshape(rows, LANES)
    t2 = (t_flat if n_tail == 0 else t_flat[:n_main]).reshape(rows, LANES)

    budget = _vmem_budget_bytes()
    in_bytes = max(x2.dtype.itemsize, t2.dtype.itemsize)

    if reduction in ("mean", "sum"):
        # VMEM/row: 2 inputs x 2 pipeline buffers + f32 intermediate allowance.
        per_row = 2 * 2 * LANES * in_bytes + 4 * LANES * 4
        br = _pick_block_rows(block_rows, rows, per_row, budget)
        steps = pl.cdiv(rows, br)

        nsplit = _num_tensorcores() if steps >= 2 else 1
        inner = pl.cdiv(steps, nsplit)
        full_steps = rows // br                       # fully-valid logical steps
        need_mask = (nsplit * inner * br) != rows

        vmem_limit = int(min(budget, max(32 << 20, per_row * br + (8 << 20))))

        def in_map(c, j):
            # Clamp so the DMA never walks past the array; duplicated logical
            # steps are zeroed in-kernel via the row mask.
            return (jnp.minimum(c * inner + j, steps - 1), 0)

        kern = functools.partial(
            _reduce_kernel, alpha=alpha, gamma=gamma, rows_valid=rows,
            block_rows=br, inner_steps=inner, full_steps=full_steps,
            need_mask=need_mask)

        partials = pl.pallas_call(
            kern,
            out_shape=jax.ShapeDtypeStruct((nsplit, SUBLANES, LANES), jnp.float32),
            grid_spec=pltpu.PrefetchScalarGridSpec(
                num_scalar_prefetch=0,
                grid=(nsplit, inner),
                in_specs=[pl.BlockSpec((br, LANES), in_map),
                          pl.BlockSpec((br, LANES), in_map)],
                out_specs=pl.BlockSpec((1, SUBLANES, LANES),
                                       lambda c, j: (c, 0, 0)),
                scratch_shapes=[pltpu.VMEM((SUBLANES, LANES), jnp.float32)],
            ),
            compiler_params=pltpu.CompilerParams(
                dimension_semantics=("parallel", "arbitrary"),
                vmem_limit_bytes=vmem_limit),
        )(x2, t2)

        total = jnp.sum(partials)                     # tiny (nsplit,8,128) reduce
        if n_tail:
            total = total + jnp.sum(_tail_loss_f32())
        if reduction == "mean":
            total = total / jnp.float32(n)
        return total.astype(orig_dtype)

    # reduction == "none"
    out_bytes = jnp.dtype(orig_dtype).itemsize
    # Budget includes the double-buffered output stream as well.
    per_row = 2 * 2 * LANES * in_bytes + 2 * LANES * out_bytes + 4 * LANES * 4
    br = _pick_block_rows(block_rows, rows, per_row, budget)
    steps = pl.cdiv(rows, br)
    vmem_limit = int(min(budget, max(32 << 20, per_row * br + (8 << 20))))

    tile = pl.BlockSpec((br, LANES), lambda i: (i, 0))
    kern = functools.partial(_elementwise_kernel, alpha=alpha, gamma=gamma)
    out_main = pl.pallas_call(
        kern,
        out_shape=jax.ShapeDtypeStruct((rows, LANES), orig_dtype),
        grid_spec=pltpu.PrefetchScalarGridSpec(
            num_scalar_prefetch=0,
            grid=(steps,),
            in_specs=[tile, tile],
            out_specs=tile,
        ),
        compiler_params=pltpu.CompilerParams(
            dimension_semantics=("parallel",),
            vmem_limit_bytes=vmem_limit),
    )(x2, t2)

    flat = out_main.reshape(-1)
    if n_tail:
        flat = jnp.concatenate([flat, _tail_loss_f32().astype(orig_dtype)])
    return flat.reshape(orig_shape)


def _reference(inputs, targets, alpha=0.5, gamma=1.0, reduction="mean"):
    """Pure-JAX reference mirroring the PyTorch module literally (unfused)."""
    x = inputs.astype(jnp.float32)
    t = targets.astype(jnp.float32)
    ce = jnp.maximum(x, 0.0) - x * t + jnp.log1p(jnp.exp(-jnp.abs(x)))
    p_t = x * t + (1.0 - x) * (1.0 - t)
    loss = ce * (1.0 - p_t) ** gamma
    if alpha >= 0:
        loss = (alpha * t + (1.0 - alpha) * (1.0 - t)) * loss
    if reduction == "mean":
        return loss.mean()
    if reduction == "sum":
        return loss.sum()
    return loss


if __name__ == "__main__":
    key = jax.random.PRNGKey(0)
    k1, k2 = jax.random.split(key)
    shape = (2, 4, 16, 16)  # NCHW-like arbitrary shape
    inputs = jax.random.normal(k1, shape, dtype=jnp.float32)
    targets = (jax.random.uniform(k2, shape) > 0.5).astype(jnp.float32)

    # Module defaults: alpha=0.5, gamma=1.0, reduction='mean'
    out = sigmoid_focal_loss(inputs, targets, alpha=0.5, gamma=1.0,
                             reduction="mean")
    out = jax.block_until_ready(out)
    ref = _reference(inputs, targets, alpha=0.5, gamma=1.0, reduction="mean")
    assert jnp.allclose(out, ref, rtol=1e-5, atol=1e-5), (out, ref)

    # also sanity-check 'sum' and 'none'
    out_sum = jax.block_until_ready(
        sigmoid_focal_loss(inputs, targets, reduction="sum"))
    assert jnp.allclose(out_sum, _reference(inputs, targets, reduction="sum"),
                        rtol=1e-5, atol=1e-4)
    out_none = jax.block_until_ready(
        sigmoid_focal_loss(inputs, targets, reduction="none"))
    assert jnp.allclose(out_none, _reference(inputs, targets, reduction="none"),
                        rtol=1e-5, atol=1e-5)

    print("KERNEL_OK")
</pallas_src>

<mosaic_0001>
module attributes {stable_mosaic.version = 11 : i64} {
  func.func @_reduce_kernel(%arg0: i32, %arg1: i32, %arg2: memref<16x128xf32, #tpu.memory_space<vmem>>, %arg3: memref<16x128xf32, #tpu.memory_space<vmem>>, %arg4: memref<1x8x128xf32, #tpu.memory_space<vmem>>, %arg5: memref<8x128xf32, #tpu.memory_space<vmem>>) attributes {dimension_semantics = [#tpu.dimension_semantics<parallel>, #tpu.dimension_semantics<arbitrary>], iteration_bounds = array<i64: 1, 1>, scalar_prefetch = 0 : i64, scratch_operands = 1 : i64, tpu.core_type = #tpu.core_type<tc>, window_params = [{transform_indices = @transform_0, window_bounds = array<i64: 16, 128>}, {transform_indices = @transform_1, window_bounds = array<i64: 16, 128>}, {transform_indices = @transform_2, window_bounds = array<i64: 1, 8, 128>}]} {
    %c0_i32 = arith.constant 0 : i32
    %0 = arith.cmpi eq, %arg1, %c0_i32 : i32
    %1 = arith.extui %0 : i1 to i32
    %c0_i32_0 = arith.constant 0 : i32
    %2 = arith.cmpi ne, %1, %c0_i32_0 : i32
    scf.if %2 {
      %cst_14 = arith.constant 0.000000e+00 : f32
      %32 = vector.broadcast %cst_14 : f32 to vector<8x128xf32>
      %c0_15 = arith.constant 0 : index
      %c0_16 = arith.constant 0 : index
      %33 = vector.load %arg5[%c0_15, %c0_16] : memref<8x128xf32, #tpu.memory_space<vmem>>, vector<8x128xf32>
      tpu.vector_store %arg5[%c0_15, %c0_16], %32 {strides = array<i32>} : memref<8x128xf32, #tpu.memory_space<vmem>>, vector<8x128xf32>,
    } else {
    }
    %c0 = arith.constant 0 : index
    %c0_1 = arith.constant 0 : index
    %3 = vector.load %arg2[%c0, %c0_1] : memref<16x128xf32, #tpu.memory_space<vmem>>, vector<16x128xf32>
    %c0_2 = arith.constant 0 : index
    %c0_3 = arith.constant 0 : index
    %4 = vector.load %arg3[%c0_2, %c0_3] : memref<16x128xf32, #tpu.memory_space<vmem>>, vector<16x128xf32>
    %5 = arith.mulf %3, %4 : vector<16x128xf32>
    %cst = arith.constant 0.000000e+00 : f32
    %6 = vector.broadcast %cst : f32 to vector<16x128xf32>
    %7 = arith.maximumf %3, %6 : vector<16x128xf32>
    %8 = arith.subf %7, %5 : vector<16x128xf32>
    %9 = math.absf %3 : vector<16x128xf32>
    %cst_4 = arith.constant 0.000000e+00 : f32
    %10 = vector.broadcast %cst_4 : f32 to vector<16x128xf32>
    %11 = arith.subf %10, %9 : vector<16x128xf32>
    %12 = math.exp %11 : vector<16x128xf32>
    %13 = math.log1p %12 : vector<16x128xf32>
    %14 = arith.addf %8, %13 : vector<16x128xf32>
    %15 = arith.addf %3, %4 : vector<16x128xf32>
    %16 = arith.addf %5, %5 : vector<16x128xf32>
    %17 = arith.subf %15, %16 : vector<16x128xf32>
    %18 = arith.mulf %14, %17 : vector<16x128xf32>
    %cst_5 = arith.constant 0.000000e+00 : f32
    %19 = vector.broadcast %cst_5 : f32 to vector<16x128xf32>
    %20 = arith.mulf %19, %4 : vector<16x128xf32>
    %cst_6 = arith.constant 5.000000e-01 : f32
    %21 = vector.broadcast %cst_6 : f32 to vector<16x128xf32>
    %22 = arith.addf %20, %21 : vector<16x128xf32>
    %23 = arith.mulf %22, %18 : vector<16x128xf32>
    %c0_7 = arith.constant 0 : index
    %c0_8 = arith.constant 0 : index
    %24 = vector.load %arg5[%c0_7, %c0_8] : memref<8x128xf32, #tpu.memory_space<vmem>>, vector<8x128xf32>
    %25 = vector.shape_cast %23 : vector<16x128xf32> to vector<2x8x128xf32>
    %cst_9 = arith.constant dense<0.000000e+00> : vector<8x128xf32>
    %26 = vector.multi_reduction <add>, %25, %cst_9 [0] : vector<2x8x128xf32> to vector<8x128xf32>
    %27 = arith.addf %24, %26 : vector<8x128xf32>
    %c0_10 = arith.constant 0 : index
    %c0_11 = arith.constant 0 : index
    %28 = vector.load %arg5[%c0_10, %c0_11] : memref<8x128xf32, #tpu.memory_space<vmem>>, vector<8x128xf32>
    tpu.vector_store %arg5[%c0_10, %c0_11], %27 {strides = array<i32>} : memref<8x128xf32, #tpu.memory_space<vmem>>, vector<8x128xf32>,
    %c0_i32_12 = arith.constant 0 : i32
    %29 = arith.cmpi eq, %arg1, %c0_i32_12 : i32
    %30 = arith.extui %29 : i1 to i32
    %c0_i32_13 = arith.constant 0 : i32
    %31 = arith.cmpi ne, %30, %c0_i32_13 : i32
    scf.if %31 {
      %c0_14 = arith.constant 0 : index
      %c0_15 = arith.constant 0 : index
      %32 = vector.load %arg5[%c0_14, %c0_15] : memref<8x128xf32, #tpu.memory_space<vmem>>, vector<8x128xf32>
      %33 = vector.shape_cast %32 : vector<8x128xf32> to vector<1x8x128xf32>
      %c0_16 = arith.constant 0 : index
      %c0_17 = arith.constant 0 : index
      %c0_18 = arith.constant 0 : index
      %34 = vector.load %arg4[%c0_16, %c0_17, %c0_18] : memref<1x8x128xf32, #tpu.memory_space<vmem>>, vector<1x8x128xf32>
      tpu.vector_store %arg4[%c0_16, %c0_17, %c0_18], %33 {strides = array<i32>} : memref<1x8x128xf32, #tpu.memory_space<vmem>>, vector<1x8x128xf32>,
    } else {
    }
    return
  }
  func.func @transform_0(%arg0: i32, %arg1: i32) -> (i32, i32) {
    %c1_i32 = arith.constant 1 : i32
    %0 = arith.muli %arg0, %c1_i32 : i32
    %1 = arith.addi %0, %arg1 : i32
    %c0_i32 = arith.constant 0 : i32
    %2 = arith.minsi %1, %c0_i32 : i32
    %c0_i32_0 = arith.constant 0 : i32
    %c0_i32_1 = arith.constant 0 : i32
    return %2, %c0_i32_0 : i32, i32
  }
  func.func @transform_1(%arg0: i32, %arg1: i32) -> (i32, i32) {
    %c1_i32 = arith.constant 1 : i32
    %0 = arith.muli %arg0, %c1_i32 : i32
    %1 = arith.addi %0, %arg1 : i32
    %c0_i32 = arith.constant 0 : i32
    %2 = arith.minsi %1, %c0_i32 : i32
    %c0_i32_0 = arith.constant 0 : i32
    %c0_i32_1 = arith.constant 0 : i32
    return %2, %c0_i32_0 : i32, i32
  }
  func.func @transform_2(%arg0: i32, %arg1: i32) -> (i32, i32, i32) {
    %c0_i32 = arith.constant 0 : i32
    %c0_i32_0 = arith.constant 0 : i32
    %c0_i32_1 = arith.constant 0 : i32
    return %arg0, %c0_i32, %c0_i32_0 : i32, i32, i32
  }
}

</mosaic_0001>

<llo_original>
// kernel: tpu_custom_call.1
$region0: #{tpu_custom_call.1}
  #allocation0 [shape = 'u32[]', space=smem, size = 0x4, offset = 0x4, fixed_abs, tag = 'smem constant byte address 0x4 - core index']
  #allocation1 [shape = 'u32[144,128]{1,0:T(1,128)}', space=vmem, size = 0x12000, scoped, tag = 'internal scratch']
  #allocation2 [shape = 'f32[8,128]{1,0:T(8,128)}', space=vmem, size = 0x1000, scoped, tag = 'scratch operand']
  %s0 = inlined_call_operand.hbm [shape: f32[16,128], index: 0, kind: input, shape index: {}]
  %s1 = inlined_call_operand.hbm [shape: f32[16,128], index: 1, kind: input, shape index: {}]
  %s2 = inlined_call_operand.hbm [shape: f32[1,8,128], index: 2, kind: output, shape index: {}]
  %s3 = sld [smem:[#allocation0]]
  $region34: #{tpu_custom_call.1} parent=0
    _
  %s5 = ssub.s32 1, %s3
  %s6 = scalar_select 0, %s5, %s3
  $region1: #{tpu_custom_call.1} parent=0
    #allocation3 [shape = 'u8[8192]{0}', space=vmem, size = 0x2000, scoped, tag = 'input window, operand 0, single buffered']
    #allocation4 [shape = 's32[1]{0}', space=sflag, size = 0x4, scoped, tag = 'scoped memory for tpu_custom_call.1']
    #allocation5 [shape = 's32[1]{0}', space=sflag, size = 0x4, scoped, tag = 'scoped memory for tpu_custom_call.1']
    #allocation6 [shape = 'u8[8192]{0}', space=vmem, size = 0x2000, scoped, tag = 'input window, operand 1, single buffered']
    #allocation7 [shape = 's32[1]{0}', space=sflag, size = 0x4, scoped, tag = 'scoped memory for tpu_custom_call.1']
    #allocation8 [shape = 'u8[4096]{0}', space=vmem, size = 0x1000, scoped, tag = 'output window, operand 0, single buffered']
    %7 = vsyncpa [#allocation4], 0
    %8 = vsyncpa [#allocation7], 0
    %9 = vsyncpa [#allocation5], 0
    // Predicated region
    $region2: #{tpu_custom_call.1} parent=1 // pred_check
      _
    $region3: #{tpu_custom_call.1} parent=1 // pred_check_branch
      %11 = sbr.rel (0) target = $region5
    $region4: #{tpu_custom_call.1} parent=1 // pred_region
      %s12 = sadd.s32 0, 0
      %p13 = scmp.lt.s32.totalorder %s12, 0
      %s14 = scalar_select %p13, %s12, 0
      %s15 = smul.u32 2, %s14
      %s17 = ssub.s32 256, 256
      %18 = vsyncadd [#allocation4], %s17
      %s19 = smul.addr %s15, 128
      %s20 = scalar_lea.hbm %s0, %s19
      %s21 = sshll.u32 [#allocation3], 4
      %s22 = int_to_ptr.vmem [resolvable:$true] %s21
      %27 = dma.hbm_to_vmem [thread:$0]  %s20, 256, %s22, [#allocation4], 128, 128, 8
    $region5: #{tpu_custom_call.1} parent=1 // pred_fallthru
      _
    // Predicated region
    $region6: #{tpu_custom_call.1} parent=1 // pred_check
      _
    $region7: #{tpu_custom_call.1} parent=1 // pred_check_branch
      %29 = sbr.rel (0) target = $region9
    $region8: #{tpu_custom_call.1} parent=1 // pred_region
      %s30 = sadd.s32 0, 0
      %p31 = scmp.lt.s32.totalorder %s30, 0
      %s32 = scalar_select %p31, %s30, 0
      %s33 = smul.u32 2, %s32
      %s35 = ssub.s32 256, 256
      %36 = vsyncadd [#allocation7], %s35
      %s37 = smul.addr %s33, 128
      %s38 = scalar_lea.hbm %s1, %s37
      %s39 = sshll.u32 [#allocation6], 4
      %s40 = int_to_ptr.vmem [resolvable:$true] %s39
      %45 = dma.hbm_to_vmem [thread:$0]  %s38, 256, %s40, [#allocation7], 128, 128, 8
    $region9: #{tpu_custom_call.1} parent=1 // pred_fallthru
      _
    // Predicated region
    $region10: #{tpu_custom_call.1} parent=1 // pred_check
      _
    $region11: #{tpu_custom_call.1} parent=1 // pred_check_branch
      %47 = sbr.rel (0) target = $region13
    $region12: #{tpu_custom_call.1} parent=1 // pred_region
      %48 = dma.done [#allocation4], 256
    $region13: #{tpu_custom_call.1} parent=1 // pred_fallthru
      _
    // Predicated region
    $region14: #{tpu_custom_call.1} parent=1 // pred_check
      _
    $region15: #{tpu_custom_call.1} parent=1 // pred_check_branch
      %50 = sbr.rel (0) target = $region17
    $region16: #{tpu_custom_call.1} parent=1 // pred_region
      %51 = dma.done [#allocation7], 256
    $region17: #{tpu_custom_call.1} parent=1 // pred_fallthru
      _
    %s52 = sadd.s32 0, 0
    %p53 = scmp.lt.s32.totalorder %s52, 0
    %s54 = scalar_select %p53, %s52, 0
    %s55 = smul.u32 2, %s54
    %s56 = sadd.s32 0, 0
    %p57 = scmp.lt.s32.totalorder %s56, 0
    %s58 = scalar_select %p57, %s56, 0
    %s59 = smul.u32 2, %s58
    %p60 = scmp.eq.s32.totalorder 0, 0
    // Predicated region
    $region18: #{tpu_custom_call.1} parent=1 // pred_check
      %p61 = pneg %p60
    $region19: #{tpu_custom_call.1} parent=1 // pred_check_branch
      %63 = sbr.rel (%p61) target = $region21
    $region20: #{tpu_custom_call.1} parent=1 // pred_region
      %64 = vst [vmem:[#allocation2] sm:$0xff] 0.0
    $region21: #{tpu_custom_call.1} parent=1 // pred_fallthru
      _
    %v65 = vld [vmem:[#allocation3] sm:$0xff]
    %v66 = vld [vmem:[#allocation3 + $0x8] sm:$0xff]
    %v67 = vld [vmem:[#allocation6] sm:$0xff]
    %v68 = vld [vmem:[#allocation6 + $0x8] sm:$0xff]
    %v69 = vmul.f32 %v65, %v67
    %v70 = vmul.f32 %v66, %v68
    %v71 = vmax.f32 %v65, 0.0
    %v72 = vmax.f32 %v66, 0.0
    %v73 = vsub.f32 %v71, %v69
    %v74 = vsub.f32 %v72, %v70
    %v75 = vand.u32 2147483647, %v65
    %v76 = vand.u32 2147483647, %v66
    %v77 = vsub.f32 0.0, %v75
    %v78 = vsub.f32 0.0, %v76
    %v79 = vmul.f32 %v77, 1.442695
    %v80 = vpow.pop %v79
    %v81 = vmul.f32 %v78, 1.442695
    %v82 = vpow.pop %v81
    %v83 = vadd.f32 %v80, 1.0
    %v84 = vlog2.pop %v83
    %v85 = vmul.f32 %v84, 0.6931472
    %v86 = vmul.f32 -0.5, %v80
    %v87 = vadd.f32 %v86, 1.0
    %v88 = vmul.f32 %v87, %v80
    %v89 = vand.u32 2147483647, %v80
    %vm90 = vcmp.lt.f32.partialorder %v89, 0.0004427343
    %v91 = vsel %vm90, %v88, %v85
    %v92 = vadd.f32 %v82, 1.0
    %v93 = vlog2.pop %v92
    %v94 = vmul.f32 %v93, 0.6931472
    %v95 = vmul.f32 -0.5, %v82
    %v96 = vadd.f32 %v95, 1.0
    %v97 = vmul.f32 %v96, %v82
    %v98 = vand.u32 2147483647, %v82
    %vm99 = vcmp.lt.f32.partialorder %v98, 0.0004427343
    %v100 = vsel %vm99, %v97, %v94
    %v101 = vadd.f32 %v73, %v91
    %v102 = vadd.f32 %v74, %v100
    %v103 = vadd.f32 %v65, %v67
    %v104 = vadd.f32 %v66, %v68
    %v105 = vadd.f32 %v69, %v69
    %v106 = vadd.f32 %v70, %v70
    %v107 = vsub.f32 %v103, %v105
    %v108 = vsub.f32 %v104, %v106
    %v109 = vmul.f32 %v101, %v107
    %v110 = vmul.f32 %v102, %v108
    %v111 = vmul.f32 %v67, 0.0
    %v112 = vmul.f32 %v68, 0.0
    %v113 = vadd.f32 %v111, 0.5
    %v114 = vadd.f32 %v112, 0.5
    %v115 = vmul.f32 %v113, %v109
    %v116 = vmul.f32 %v114, %v110
    %v117 = vld [vmem:[#allocation2] sm:$0xff]
    %v118 = vadd.f32 %v115, %v116
    %v119 = vadd.f32 %v117, %v118
    %120 = vst [vmem:[#allocation2] sm:$0xff] %v119
    // Predicated region
    $region22: #{tpu_custom_call.1} parent=1 // pred_check
      %p121 = pneg %p60
    $region23: #{tpu_custom_call.1} parent=1 // pred_check_branch
      %123 = sbr.rel (%p121) target = $region25
    $region24: #{tpu_custom_call.1} parent=1 // pred_region
      %v124 = vld [vmem:[#allocation2] sm:$0xff]
      %125 = vst [vmem:[#allocation8] sm:$0xff] %v124
    $region25: #{tpu_custom_call.1} parent=1 // pred_fallthru
      _
    // Predicated region
    $region26: #{tpu_custom_call.1} parent=1 // pred_check
      _
    $region27: #{tpu_custom_call.1} parent=1 // pred_check_branch
      %127 = sbr.rel (0) target = $region29
    $region28: #{tpu_custom_call.1} parent=1 // pred_region
      %s129 = ssub.s32 128, 128
      %130 = vsyncadd [#allocation5], %s129
      %s132 = sshll.u32 [#allocation8], 4
      %s133 = int_to_ptr.vmem [resolvable:$true] %s132
      %135 = dma.vmem_to_hbm [thread:$0]  %s133, 128, %s2, [#allocation5]
    $region29: #{tpu_custom_call.1} parent=1 // pred_fallthru
      _
    // Predicated region
    $region30: #{tpu_custom_call.1} parent=1 // pred_check
      _
    $region31: #{tpu_custom_call.1} parent=1 // pred_check_branch
      %137 = sbr.rel (0) target = $region33
    $region32: #{tpu_custom_call.1} parent=1 // pred_region
      %138 = dma.done [#allocation5], 128
    $region33: #{tpu_custom_call.1} parent=1 // pred_fallthru
      _
    %139 = vsyncpa [#allocation4], 1
    %140 = vsyncpa [#allocation7], 1
    %141 = vsyncpa [#allocation5], 1

</llo_original>
